<compile_context>
chip_gen: v5e
topology: v5e:2x2
jax: 0.10.0
libtpu: 0.0.40
codegen_flags: <defaults>
</compile_context>

<pallas_src>
import jax
import jax.numpy as jnp
from jax.experimental import pallas as pl
from jax.experimental.pallas import tpu as pltpu

LANES = 128
SUBLANES = 8
ACC_ROWS = 32          # 4 f32 vregs of independent partial sums (ILP)
CHUNK_ROWS = 256       # rows per inner-loop iteration (bounds vreg live ranges)
MAX_BLOCK_ROWS = 4096  # 2 MiB f32/input block; 2 in x 2 buf = 8 MiB VMEM
NCORES = 2             # leading "parallel" grid axis (both TCs on v7x)


def _cdiv(a, b):
    return (a + b - 1) // b


def _bce_elem(x, y):
    # Numerically stable BCE with logits (same formulation as PyTorch):
    #   max(x, 0) - x*y + log(1 + exp(-|x|))
    x = x.astype(jnp.float32)
    y = y.astype(jnp.float32)
    return jnp.maximum(x, 0.0) - x * y + jnp.log1p(jnp.exp(-jnp.abs(x)))


def _make_bce_sum_kernel(block_rows, nsteps, steps_per_core, tail_rows):
    """Per-core BCE-with-logits partial-sum kernel with static geometry.

    Grid is (NCORES, steps_per_core).  Global row-block index g = p*spc + i;
    block g == nsteps-1 holds `tail_rows` valid rows; blocks g >= nsteps are
    clamped duplicates whose compute is skipped.
    """

    def kernel(x_ref, y_ref, out_ref, acc_ref):
        p = pl.program_id(0)                 # core-parallel axis
        i = pl.program_id(1)                 # sequential accumulation axis
        g = p * steps_per_core + i           # global row-block index

        @pl.when(i == 0)
        def _init():
            acc_ref[...] = jnp.zeros_like(acc_ref)

        def add_chunk(c):
            r0 = pl.multiple_of(c * CHUNK_ROWS, CHUNK_ROWS)
            loss = _bce_elem(x_ref[pl.ds(r0, CHUNK_ROWS), :],
                             y_ref[pl.ds(r0, CHUNK_ROWS), :])
            # Fold (256,128) onto the (32,128) accumulator: pure vreg adds.
            acc_ref[...] += jnp.sum(
                loss.reshape(CHUNK_ROWS // ACC_ROWS, ACC_ROWS, LANES), axis=0)

        def process(valid_rows):
            # `valid_rows` is static: full chunks + at most one static-size
            # partial chunk.  OOB/garbage rows of the block are never read.
            nfull = valid_rows // CHUNK_ROWS
            prows = valid_rows - nfull * CHUNK_ROWS
            if nfull:
                @pl.loop(0, nfull)
                def _(c):
                    add_chunk(c)
            if prows:
                r0 = nfull * CHUNK_ROWS      # static offset, static size
                loss = _bce_elem(x_ref[pl.ds(r0, prows), :],
                                 y_ref[pl.ds(r0, prows), :])
                acc_ref[0:1, :] += jnp.sum(loss, axis=0, keepdims=True)

        if tail_rows < block_rows:
            @pl.when(g < nsteps - 1)
            def _full():
                process(block_rows)

            @pl.when(g == nsteps - 1)
            def _tail():
                process(tail_rows)
        else:
            @pl.when(g < nsteps)
            def _full():
                process(block_rows)

        @pl.when(i == steps_per_core - 1)
        def _finalize():
            # Fold (32,128) -> (8,128) per-core, per-lane partial sums.
            out_ref[...] = jnp.sum(
                acc_ref[...].reshape(ACC_ROWS // SUBLANES, SUBLANES, LANES),
                axis=0)

    return kernel


@jax.jit
def bce_loss(y_pred, y_true):
    """Mean BCE-with-logits over flattened inputs via a Pallas TPU kernel."""
    n = y_pred.size  # static under jit
    if n == 0:
        # Mean over zero elements (matches PyTorch mean reduction: NaN).
        return jnp.array(jnp.nan, dtype=jnp.float32)

    x = jnp.reshape(y_pred, (-1,))
    y = jnp.reshape(y_true, (-1,))

    rows = n // LANES
    rem = n - rows * LANES  # < 128 trailing elements, summed in plain jnp

    total = jnp.zeros((), jnp.float32)
    if rem:
        total = total + jnp.sum(_bce_elem(x[rows * LANES:], y[rows * LANES:]))

    if rows:
        # No jnp.pad: for n % 128 == 0 (typical) this is a pure reshape;
        # otherwise only a prefix slice of the flat view is materialized.
        x2 = x[: rows * LANES].reshape(rows, LANES)
        y2 = y[: rows * LANES].reshape(rows, LANES)

        # Block: full extent if small (always legal), else 4096-row tiles.
        block_rows = rows if rows <= MAX_BLOCK_ROWS else MAX_BLOCK_ROWS
        nsteps = _cdiv(rows, block_rows)
        steps_per_core = _cdiv(nsteps, NCORES)
        tail_rows = rows - (nsteps - 1) * block_rows  # valid rows, last block

        kernel = _make_bce_sum_kernel(block_rows, nsteps, steps_per_core,
                                      tail_rows)

        def in_map(p, i):
            # Clamp so the (at most one) idle step of the second core stays
            # in range; its compute is skipped inside the kernel.
            return (jnp.minimum(p * steps_per_core + i, nsteps - 1), 0)

        bytes_in = rows * LANES * (x2.dtype.itemsize + y2.dtype.itemsize)
        cost = pl.CostEstimate(
            flops=6 * rows * LANES,
            transcendentals=2 * rows * LANES,
            bytes_accessed=bytes_in + NCORES * SUBLANES * LANES * 4)

        partial = pl.pallas_call(
            kernel,
            out_shape=jax.ShapeDtypeStruct((NCORES * SUBLANES, LANES),
                                           jnp.float32),
            grid=(NCORES, steps_per_core),
            in_specs=[
                pl.BlockSpec((block_rows, LANES), in_map),
                pl.BlockSpec((block_rows, LANES), in_map),
            ],
            out_specs=pl.BlockSpec((SUBLANES, LANES), lambda p, i: (p, 0)),
            scratch_shapes=[pltpu.VMEM((ACC_ROWS, LANES), jnp.float32)],
            compiler_params=pltpu.CompilerParams(
                dimension_semantics=("parallel", "arbitrary"),
            ),
            cost_estimate=cost,
        )(x2, y2)

        total = total + jnp.sum(partial)

    return total / jnp.float32(n)


def _reference_bce(y_pred, y_true):
    x = jnp.ravel(y_pred).astype(jnp.float32)
    y = jnp.ravel(y_true).astype(jnp.float32)
    loss = jnp.maximum(x, 0.0) - x * y + jnp.log1p(jnp.exp(-jnp.abs(x)))
    return jnp.mean(loss)


if __name__ == "__main__":
    key = jax.random.PRNGKey(0)
    k1, k2, k3, k4, k5, k6 = jax.random.split(key, 6)

    # batch=2, channels=4, spatial=16x16 -> 2048 elements (lane-aligned).
    y_pred = jax.random.normal(k1, (2, 4, 16, 16), dtype=jnp.float32)  # logits
    y_true = (jax.random.uniform(k2, (2, 4, 16, 16)) > 0.5).astype(jnp.float32)
    loss = bce_loss(y_pred, y_true)
    jax.block_until_ready(loss)
    ref = _reference_bce(y_pred, y_true)
    assert jnp.allclose(loss, ref, rtol=1e-5, atol=1e-5), (loss, ref)

    # Ragged, non-lane-aligned size (1155 elements): remainder + partial rows.
    yp2 = jax.random.normal(k3, (3, 5, 7, 11), dtype=jnp.float32)
    yt2 = (jax.random.uniform(k4, (3, 5, 7, 11)) > 0.5).astype(jnp.float32)
    loss2 = bce_loss(yp2, yt2)
    jax.block_until_ready(loss2)
    ref2 = _reference_bce(yp2, yt2)
    assert jnp.allclose(loss2, ref2, rtol=1e-5, atol=1e-5), (loss2, ref2)

    # Multi-block size with a partial last block: exercises the 2-core split,
    # chunked accumulation loop and the tail path (5760 rows of 128).
    yp3 = jax.random.normal(k5, (2, 4, 288, 320), dtype=jnp.float32)
    yt3 = (jax.random.uniform(k6, (2, 4, 288, 320)) > 0.5).astype(jnp.float32)
    loss3 = bce_loss(yp3, yt3)
    jax.block_until_ready(loss3)
    ref3 = _reference_bce(yp3, yt3)
    assert jnp.allclose(loss3, ref3, rtol=1e-4, atol=1e-5), (loss3, ref3)

    print("KERNEL_OK")
</pallas_src>

<mosaic_0001>
module attributes {stable_mosaic.version = 11 : i64} {
  func.func @kernel(%arg0: i32, %arg1: i32, %arg2: memref<16x128xf32, #tpu.memory_space<vmem>>, %arg3: memref<16x128xf32, #tpu.memory_space<vmem>>, %arg4: memref<8x128xf32, #tpu.memory_space<vmem>>, %arg5: memref<32x128xf32, #tpu.memory_space<vmem>>) attributes {dimension_semantics = [#tpu.dimension_semantics<parallel>, #tpu.dimension_semantics<arbitrary>], iteration_bounds = array<i64: 2, 1>, scalar_prefetch = 0 : i64, scratch_operands = 1 : i64, tpu.core_type = #tpu.core_type<tc>, window_params = [{transform_indices = @transform_0, window_bounds = array<i64: 16, 128>}, {transform_indices = @transform_1, window_bounds = array<i64: 16, 128>}, {transform_indices = @transform_2, window_bounds = array<i64: 8, 128>}]} {
    %c1_i32 = arith.constant 1 : i32
    %0 = arith.muli %arg0, %c1_i32 : i32
    %1 = arith.addi %0, %arg1 : i32
    %c0_i32 = arith.constant 0 : i32
    %2 = arith.cmpi eq, %arg1, %c0_i32 : i32
    %3 = arith.extui %2 : i1 to i32
    %c0_i32_0 = arith.constant 0 : i32
    %4 = arith.cmpi ne, %3, %c0_i32_0 : i32
    scf.if %4 {
      %cst = arith.constant 0.000000e+00 : f32
      %11 = vector.broadcast %cst : f32 to vector<32x128xf32>
      %c0 = arith.constant 0 : index
      %c0_5 = arith.constant 0 : index
      %12 = vector.load %arg5[%c0, %c0_5] : memref<32x128xf32, #tpu.memory_space<vmem>>, vector<32x128xf32>
      tpu.vector_store %arg5[%c0, %c0_5], %11 {strides = array<i32>} : memref<32x128xf32, #tpu.memory_space<vmem>>, vector<32x128xf32>,
    } else {
    }
    %c1_i32_1 = arith.constant 1 : i32
    %5 = arith.cmpi slt, %1, %c1_i32_1 : i32
    %6 = arith.extui %5 : i1 to i32
    %c0_i32_2 = arith.constant 0 : i32
    %7 = arith.cmpi ne, %6, %c0_i32_2 : i32
    scf.if %7 {
      %c0 = arith.constant 0 : index
      %c0_5 = arith.constant 0 : index
      %11 = vector.load %arg2[%c0, %c0_5] : memref<16x128xf32, #tpu.memory_space<vmem>>, vector<16x128xf32>
      %c0_6 = arith.constant 0 : index
      %c0_7 = arith.constant 0 : index
      %12 = vector.load %arg3[%c0_6, %c0_7] : memref<16x128xf32, #tpu.memory_space<vmem>>, vector<16x128xf32>
      %cst = arith.constant 0.000000e+00 : f32
      %13 = vector.broadcast %cst : f32 to vector<16x128xf32>
      %14 = arith.maximumf %11, %13 : vector<16x128xf32>
      %15 = arith.mulf %11, %12 : vector<16x128xf32>
      %16 = arith.subf %14, %15 : vector<16x128xf32>
      %17 = math.absf %11 : vector<16x128xf32>
      %cst_8 = arith.constant 0.000000e+00 : f32
      %18 = vector.broadcast %cst_8 : f32 to vector<16x128xf32>
      %19 = arith.subf %18, %17 : vector<16x128xf32>
      %20 = math.exp %19 : vector<16x128xf32>
      %21 = math.log1p %20 : vector<16x128xf32>
      %22 = arith.addf %16, %21 : vector<16x128xf32>
      %c0_9 = arith.constant 0 : index
      %c0_10 = arith.constant 0 : index
      %23 = vector.load %arg5[%c0_9, %c0_10] : memref<32x128xf32, #tpu.memory_space<vmem>>, vector<1x128xf32>
      %cst_11 = arith.constant dense<0.000000e+00> : vector<128xf32>
      %24 = vector.multi_reduction <add>, %22, %cst_11 [0] : vector<16x128xf32> to vector<128xf32>
      %25 = vector.shape_cast %24 : vector<128xf32> to vector<1x128xf32>
      %26 = arith.addf %23, %25 : vector<1x128xf32>
      %c0_12 = arith.constant 0 : index
      %c0_13 = arith.constant 0 : index
      %27 = vector.load %arg5[%c0_12, %c0_13] : memref<32x128xf32, #tpu.memory_space<vmem>>, vector<1x128xf32>
      tpu.vector_store %arg5[%c0_12, %c0_13], %26 {strides = array<i32>} : memref<32x128xf32, #tpu.memory_space<vmem>>, vector<1x128xf32>,
    } else {
    }
    %c0_i32_3 = arith.constant 0 : i32
    %8 = arith.cmpi eq, %arg1, %c0_i32_3 : i32
    %9 = arith.extui %8 : i1 to i32
    %c0_i32_4 = arith.constant 0 : i32
    %10 = arith.cmpi ne, %9, %c0_i32_4 : i32
    scf.if %10 {
      %c0 = arith.constant 0 : index
      %c0_5 = arith.constant 0 : index
      %11 = vector.load %arg5[%c0, %c0_5] : memref<32x128xf32, #tpu.memory_space<vmem>>, vector<32x128xf32>
      %12 = vector.shape_cast %11 : vector<32x128xf32> to vector<4x8x128xf32>
      %cst = arith.constant dense<0.000000e+00> : vector<8x128xf32>
      %13 = vector.multi_reduction <add>, %12, %cst [0] : vector<4x8x128xf32> to vector<8x128xf32>
      %c0_6 = arith.constant 0 : index
      %c0_7 = arith.constant 0 : index
      %14 = vector.load %arg4[%c0_6, %c0_7] : memref<8x128xf32, #tpu.memory_space<vmem>>, vector<8x128xf32>
      tpu.vector_store %arg4[%c0_6, %c0_7], %13 {strides = array<i32>} : memref<8x128xf32, #tpu.memory_space<vmem>>, vector<8x128xf32>,
    } else {
    }
    return
  }
  func.func @transform_0(%arg0: i32, %arg1: i32) -> (i32, i32) {
    %c1_i32 = arith.constant 1 : i32
    %0 = arith.muli %arg0, %c1_i32 : i32
    %1 = arith.addi %0, %arg1 : i32
    %c0_i32 = arith.constant 0 : i32
    %2 = arith.minsi %1, %c0_i32 : i32
    %c0_i32_0 = arith.constant 0 : i32
    %c0_i32_1 = arith.constant 0 : i32
    return %2, %c0_i32_0 : i32, i32
  }
  func.func @transform_1(%arg0: i32, %arg1: i32) -> (i32, i32) {
    %c1_i32 = arith.constant 1 : i32
    %0 = arith.muli %arg0, %c1_i32 : i32
    %1 = arith.addi %0, %arg1 : i32
    %c0_i32 = arith.constant 0 : i32
    %2 = arith.minsi %1, %c0_i32 : i32
    %c0_i32_0 = arith.constant 0 : i32
    %c0_i32_1 = arith.constant 0 : i32
    return %2, %c0_i32_0 : i32, i32
  }
  func.func @transform_2(%arg0: i32, %arg1: i32) -> (i32, i32) {
    %c0_i32 = arith.constant 0 : i32
    %c0_i32_0 = arith.constant 0 : i32
    return %arg0, %c0_i32 : i32, i32
  }
}

</mosaic_0001>

<llo_original>
// kernel: bce_loss.1
$region0: #{bce_loss.1}
  #allocation0 [shape = 'u32[]', space=smem, size = 0x4, offset = 0x4, fixed_abs, tag = 'smem constant byte address 0x4 - core index']
  #allocation1 [shape = 'u32[72,128]{1,0:T(1,128)}', space=vmem, size = 0x9000, scoped, tag = 'internal scratch']
  #allocation2 [shape = 'f32[32,128]{1,0:T(8,128)}', space=vmem, size = 0x4000, scoped, tag = 'scratch operand']
  %s0 = inlined_call_operand.vmem [shape: f32[16,128], index: 0, kind: input, shape index: {}]
  %s1 = inlined_call_operand.vmem [shape: f32[16,128], index: 1, kind: input, shape index: {}]
  %s2 = inlined_call_operand.vmem [shape: f32[16,128], index: 2, kind: output, shape index: {}]
  %s3 = sld [smem:[#allocation0]]
  $region53: #{bce_loss.1} parent=0
    _
  %s5 = ssub.s32 1, %s3
  %s6 = scalar_select 0, %s5, %s3
  loop: start=0, step=1, limit=4
  $region2: #{bce_loss.1} parent=0 // loop_pre_header
    _
  $region3: #{bce_loss.1} parent=0 // loop_header
    %s8 = sphi 0, %s12
    %p9 = scmp.ge.s32.totalorder %s8, 4
    %s15 = sphi 0, %s27
    %s16 = sphi 0, %s23
    %s17 = sphi 0, %s15
    %s18 = sphi 0, %s16
    %s19 = sphi 0, %s17
    %s20 = sphi 0, %s18
    %s36 = sphi 0, %s38
    %s39 = sphi 0, %s36
    %s40 = sphi 0, %s39
    %s56 = sphi 0, %s40
    %s68 = sphi 0, %s70
    %s71 = sphi 0, %s68
    %s72 = sphi 0, %s71
    %s88 = sphi 0, %s72
    %s94 = sphi 0, %s96
    %s97 = sphi 0, %s94
    %s98 = sphi 0, %s97
    %s114 = sphi 0, %s98
  $region4: #{bce_loss.1} parent=0 // loop_header_branch
    %11 = sbr.rel (%p9) target = $region8
  $region5: #{bce_loss.1} parent=0 // loop_body
    %s13 = ssub.s32 %s8, 1
    %s14 = ssub.s32 %s8, 2
    %s21 = sadd.s32 1, %s16
    %p22 = scmp.ge.s32.totalorder %s21, 1
    %s23 = scalar_select %p22, 0, %s21
    %s24 = sadd.s32 1, %s15
    %s25 = scalar_select %p22, %s24, %s15
    %p26 = scmp.ge.s32.totalorder %s25, 2
    %s27 = scalar_select %p26, 0, %s25
    %s28 = sadd.s32 %s15, %s16
    %p29 = scmp.lt.s32.totalorder %s28, 0
    %s30 = scalar_select %p29, %s28, 0
    %s31 = sadd.s32 %s27, %s23
    %p32 = scmp.lt.s32.totalorder %s31, 0
    %s33 = scalar_select %p32, %s31, 0
    %s34 = ssub.s32 %s30, %s33
    %p35 = scmp.eq.s32.totalorder %s34, 0
    %s37 = sadd.s32 %s36, 1
    %s38 = scalar_select %p35, %s36, %s37
    %p41 = pneg %p35
    %p42 = scmp.eq.s32.totalorder %s8, 1
    %p43 = por %p41, %p42
    %p44 = scmp.ne.s32.totalorder %s36, %s39
    %p45 = scmp.eq.s32.totalorder %s8, 0
    %p46 = por %p44, %p45
    %p47 = scmp.ne.s32.totalorder %s36, %s39
    %p48 = scmp.eq.s32.totalorder %s13, 1
    %p49 = por %p47, %p48
    %p50 = scmp.ne.s32.totalorder %s39, %s40
    %p51 = scmp.eq.s32.totalorder %s13, 0
    %p52 = por %p50, %p51
    %p53 = scmp.ne.s32.totalorder %s39, %s40
    %p54 = scmp.eq.s32.totalorder %s14, 1
    %p55 = por %p53, %p54
    %p57 = scmp.ne.s32.totalorder %s40, %s56
    %p58 = scmp.eq.s32.totalorder %s14, 0
    %p59 = por %p57, %p58
    %s60 = sadd.s32 %s15, %s16
    %p61 = scmp.lt.s32.totalorder %s60, 0
    %s62 = scalar_select %p61, %s60, 0
    %s63 = sadd.s32 %s27, %s23
    %p64 = scmp.lt.s32.totalorder %s63, 0
    %s65 = scalar_select %p64, %s63, 0
    %s66 = ssub.s32 %s62, %s65
    %p67 = scmp.eq.s32.totalorder %s66, 0
    %s69 = sadd.s32 %s68, 1
    %s70 = scalar_select %p67, %s68, %s69
    %p73 = pneg %p67
    %p74 = scmp.eq.s32.totalorder %s8, 1
    %p75 = por %p73, %p74
    %p76 = scmp.ne.s32.totalorder %s68, %s71
    %p77 = scmp.eq.s32.totalorder %s8, 0
    %p78 = por %p76, %p77
    %p79 = scmp.ne.s32.totalorder %s68, %s71
    %p80 = scmp.eq.s32.totalorder %s13, 1
    %p81 = por %p79, %p80
    %p82 = scmp.ne.s32.totalorder %s71, %s72
    %p83 = scmp.eq.s32.totalorder %s13, 0
    %p84 = por %p82, %p83
    %p85 = scmp.ne.s32.totalorder %s71, %s72
    %p86 = scmp.eq.s32.totalorder %s14, 1
    %p87 = por %p85, %p86
    %p89 = scmp.ne.s32.totalorder %s72, %s88
    %p90 = scmp.eq.s32.totalorder %s14, 0
    %p91 = por %p89, %p90
    %s92 = ssub.s32 %s15, %s27
    %p93 = scmp.eq.s32.totalorder %s92, 0
    %s95 = sadd.s32 %s94, 1
    %s96 = scalar_select %p93, %s94, %s95
    %p99 = pneg %p93
    %p100 = scmp.eq.s32.totalorder %s8, 1
    %p101 = por %p99, %p100
    %p102 = scmp.ne.s32.totalorder %s94, %s97
    %p103 = scmp.eq.s32.totalorder %s8, 0
    %p104 = por %p102, %p103
    %p105 = scmp.ne.s32.totalorder %s94, %s97
    %p106 = scmp.eq.s32.totalorder %s13, 1
    %p107 = por %p105, %p106
    %p108 = scmp.ne.s32.totalorder %s97, %s98
    %p109 = scmp.eq.s32.totalorder %s13, 0
    %p110 = por %p108, %p109
    %p111 = scmp.ne.s32.totalorder %s97, %s98
    %p112 = scmp.eq.s32.totalorder %s14, 1
    %p113 = por %p111, %p112
    %p115 = scmp.ne.s32.totalorder %s98, %s114
    %p116 = scmp.eq.s32.totalorder %s14, 0
    %p117 = por %p115, %p116
    %p118 = scmp.le.s32.totalorder 1, %s8
    %p119 = scmp.lt.s32.totalorder %s8, 3
    %p120 = pnand %p118, %p119
    %p121 = pneg %p120
    // Predicated region
    $region9: #{bce_loss.1} parent=5 // pred_check
      _
    $region10: #{bce_loss.1} parent=5 // pred_check_branch
      %123 = sbr.rel (%p120) target = $region12
    $region11: #{bce_loss.1} parent=5 // pred_region
      %s124 = ssub.s32 %s8, 1
    $region12: #{bce_loss.1} parent=5 // pred_fallthru
      _
    %p125 = scmp.lt.s32.totalorder %s8, 2
    // Predicated region
    $region13: #{bce_loss.1} parent=5 // pred_check
      %p126 = pneg %p125
    $region14: #{bce_loss.1} parent=5 // pred_check_branch
      %128 = sbr.rel (%p126) target = $region16
    $region15: #{bce_loss.1} parent=5 // pred_region
      // Predicated region
      $region17: #{bce_loss.1} parent=15 // pred_check
        %p129 = pneg %p46
      $region18: #{bce_loss.1} parent=15 // pred_check_branch
        %131 = sbr.rel (%p129) target = $region20
      $region19: #{bce_loss.1} parent=15 // pred_region
        %s132 = sadd.s32 %s15, %s16
        %p133 = scmp.lt.s32.totalorder %s132, 0
        %s134 = scalar_select %p133, %s132, 0
        %s135 = smul.u32 2, %s134
        %p136 = scmp.lt.s32.totalorder %s135, 1
        %s137 = scalar_select %p136, %s135, 1
        %s138 = smul.addr %s137, 8
        %s139 = scalar_lea.vmem %s0, %s138
        %s140 = sadd.s32 %s15, %s16
        %p141 = scmp.lt.s32.totalorder %s140, 0
        %s142 = scalar_select %p141, %s140, 0
        %s143 = smul.u32 2, %s142
      $region20: #{bce_loss.1} parent=15 // pred_fallthru
        _
      // Predicated region
      $region21: #{bce_loss.1} parent=15 // pred_check
        %p144 = pneg %p78
      $region22: #{bce_loss.1} parent=15 // pred_check_branch
        %146 = sbr.rel (%p144) target = $region24
      $region23: #{bce_loss.1} parent=15 // pred_region
        %s147 = sadd.s32 %s15, %s16
        %p148 = scmp.lt.s32.totalorder %s147, 0
        %s149 = scalar_select %p148, %s147, 0
        %s150 = smul.u32 2, %s149
        %p151 = scmp.lt.s32.totalorder %s150, 1
        %s152 = scalar_select %p151, %s150, 1
        %s153 = smul.addr %s152, 8
        %s154 = scalar_lea.vmem %s1, %s153
        %s155 = sadd.s32 %s15, %s16
        %p156 = scmp.lt.s32.totalorder %s155, 0
        %s157 = scalar_select %p156, %s155, 0
        %s158 = smul.u32 2, %s157
      $region24: #{bce_loss.1} parent=15 // pred_fallthru
        _
    $region16: #{bce_loss.1} parent=5 // pred_fallthru
      _
    %p159 = scmp.le.s32.totalorder 1, %s8
    %p160 = scmp.lt.s32.totalorder %s8, 3
    %p161 = pnand %p159, %p160
    %p162 = pneg %p161
    // Predicated region
    $region25: #{bce_loss.1} parent=5 // pred_check
      _
    $region26: #{bce_loss.1} parent=5 // pred_check_branch
      %164 = sbr.rel (%p161) target = $region28
    $region27: #{bce_loss.1} parent=5 // pred_region
      %s165 = ssub.s32 %s8, 1
      %s166 = sadd.s32 %s17, %s18
      %p167 = scmp.lt.s32.totalorder %s166, 0
      %s168 = scalar_select %p167, %s166, 0
      %s169 = smul.u32 2, %s168
      %p170 = scmp.lt.s32.totalorder %s169, 1
      %s171 = scalar_select %p170, %s169, 1
      %s172 = smul.addr %s171, 8
      %s173 = scalar_lea.vmem %s0, %s172
      %p174 = pneg %p52
      %p175 = pneg %p49
      %s176 = sadd.s32 %s17, %s18
      %p177 = scmp.lt.s32.totalorder %s176, 0
      %s178 = scalar_select %p177, %s176, 0
      %s179 = smul.u32 2, %s178
      %p180 = scmp.lt.s32.totalorder %s179, 1
      %s181 = scalar_select %p180, %s179, 1
      %s182 = smul.addr %s181, 8
      %s183 = scalar_lea.vmem %s1, %s182
      %p184 = pneg %p84
      %p185 = pneg %p81
      %p186 = pneg %p110
      %p187 = pneg %p107
      %p188 = scmp.lt.s32.totalorder %s17, 1
      %s189 = scalar_select %p188, %s17, 1
      %s190 = smul.addr %s189, 8
      %s191 = scalar_lea.vmem %s2, %s190
      %s192 = sadd.s32 %s17, %s18
      %p193 = scmp.lt.s32.totalorder %s192, 0
      %s194 = scalar_select %p193, %s192, 0
      %s195 = smul.u32 2, %s194
      %p196 = scmp.lt.s32.totalorder %s195, 1
      %s197 = scalar_select %p196, %s195, 1
      %s198 = smul.addr %s197, 8
      %s199 = scalar_lea.vmem %s0, %s198
      %s200 = sadd.s32 %s17, %s18
      %p201 = scmp.lt.s32.totalorder %s200, 0
      %s202 = scalar_select %p201, %s200, 0
      %s203 = smul.u32 2, %s202
      %s204 = sadd.s32 %s17, %s18
      %p205 = scmp.lt.s32.totalorder %s204, 0
      %s206 = scalar_select %p205, %s204, 0
      %s207 = smul.u32 2, %s206
      %p208 = scmp.lt.s32.totalorder %s207, 1
      %s209 = scalar_select %p208, %s207, 1
      %s210 = smul.addr %s209, 8
      %s211 = scalar_lea.vmem %s1, %s210
      %s212 = sadd.s32 %s17, %s18
      %p213 = scmp.lt.s32.totalorder %s212, 0
      %s214 = scalar_select %p213, %s212, 0
      %s215 = smul.u32 2, %s214
      %p216 = scmp.lt.s32.totalorder %s17, 1
      %s217 = scalar_select %p216, %s17, 1
      %s218 = smul.addr %s217, 8
      %s219 = scalar_lea.vmem %s2, %s218
      %s220 = sadd.s32 %s17, %s18
      %p221 = scmp.eq.s32.totalorder %s18, 0
      // Predicated region
      $region29: #{bce_loss.1} parent=27 // pred_check
        %p222 = pneg %p221
      $region30: #{bce_loss.1} parent=27 // pred_check_branch
        %224 = sbr.rel (%p222) target = $region32
      $region31: #{bce_loss.1} parent=27 // pred_region
        %225 = vst [vmem:[#allocation2] sm:$0xff] 0.0
        %226 = vst [vmem:[#allocation2 + $0x8] sm:$0xff] 0.0
        %227 = vst [vmem:[#allocation2 + $0x10] sm:$0xff] 0.0
        %228 = vst [vmem:[#allocation2 + $0x18] sm:$0xff] 0.0
      $region32: #{bce_loss.1} parent=27 // pred_fallthru
        _
      %p229 = scmp.lt.s32.totalorder %s220, 1
      // Predicated region
      $region33: #{bce_loss.1} parent=27 // pred_check
        %p230 = pneg %p229
      $region34: #{bce_loss.1} parent=27 // pred_check_branch
        %232 = sbr.rel (%p230) target = $region36
      $region35: #{bce_loss.1} parent=27 // pred_region
        %v233 = vld [vmem:[%s199] sm:$0xff]
        %v234 = vld [vmem:[%s199 + $0x8] sm:$0xff]
        %v235 = vld [vmem:[%s211] sm:$0xff]
        %v236 = vld [vmem:[%s211 + $0x8] sm:$0xff]
        %v237 = vmax.f32 %v233, 0.0
        %v238 = vmax.f32 %v234, 0.0
        %v239 = vmul.f32 %v233, %v235
        %v240 = vmul.f32 %v234, %v236
        %v241 = vsub.f32 %v237, %v239
        %v242 = vsub.f32 %v238, %v240
        %v243 = vand.u32 2147483647, %v233
        %v244 = vand.u32 2147483647, %v234
        %v245 = vsub.f32 0.0, %v243
        %v246 = vsub.f32 0.0, %v244
        %v247 = vmul.f32 %v245, 1.442695
        %v248 = vpow.pop %v247
        %v249 = vmul.f32 %v246, 1.442695
        %v250 = vpow.pop %v249
        %v251 = vadd.f32 %v248, 1.0
        %v252 = vlog2.pop %v251
        %v253 = vmul.f32 %v252, 0.6931472
        %v254 = vmul.f32 -0.5, %v248
        %v255 = vadd.f32 %v254, 1.0
        %v256 = vmul.f32 %v255, %v248
        %v257 = vand.u32 2147483647, %v248
        %vm258 = vcmp.lt.f32.partialorder %v257, 0.0004427343
        %v259 = vsel %vm258, %v256, %v253
        %v260 = vadd.f32 %v250, 1.0
        %v261 = vlog2.pop %v260
        %v262 = vmul.f32 %v261, 0.6931472
        %v263 = vmul.f32 -0.5, %v250
        %v264 = vadd.f32 %v263, 1.0
        %v265 = vmul.f32 %v264, %v250
        %v266 = vand.u32 2147483647, %v250
        %vm267 = vcmp.lt.f32.partialorder %v266, 0.0004427343
        %v268 = vsel %vm267, %v265, %v262
        %v269 = vadd.f32 %v241, %v259
        %v270 = vadd.f32 %v242, %v268
        %v271 = vld [vmem:[#allocation2] sm:$0x1]
        %v272 = vadd.f32 %v269, %v270
        %v273 = vrot.slane %v272, 4
        %v274 = vadd.f32 %v272, %v273
        %v275 = vrot.slane %v274, 2
        %v276 = vadd.f32 %v274, %v275
        %v277 = vrot.slane %v276, 1
        %v278 = vadd.f32 %v276, %v277
        %v279 = vadd.f32 %v271, %v278
        %280 = vst [vmem:[#allocation2] sm:$0x1] %v279
      $region36: #{bce_loss.1} parent=27 // pred_fallthru
        _
      // Predicated region
      $region37: #{bce_loss.1} parent=27 // pred_check
        %p281 = pneg %p221
      $region38: #{bce_loss.1} parent=27 // pred_check_branch
        %283 = sbr.rel (%p281) target = $region40
      $region39: #{bce_loss.1} parent=27 // pred_region
        %v284 = vld [vmem:[#allocation2] sm:$0xff]
        %v285 = vld [vmem:[#allocation2 + $0x8] sm:$0xff]
        %v286 = vld [vmem:[#allocation2 + $0x10] sm:$0xff]
        %v287 = vld [vmem:[#allocation2 + $0x18] sm:$0xff]
        %v288 = vadd.f32 %v284, %v285
        %v289 = vadd.f32 %v288, %v286
        %v290 = vadd.f32 %v289, %v287
        %291 = vst [vmem:[%s219] sm:$0xff] %v290
      $region40: #{bce_loss.1} parent=27 // pred_fallthru
        _
      %p292 = scmp.lt.s32.totalorder %s17, 1
      %s293 = scalar_select %p292, %s17, 1
      %s294 = smul.addr %s293, 8
      %s295 = scalar_lea.vmem %s2, %s294
      // Predicated region
      $region41: #{bce_loss.1} parent=27 // pred_check
        %p296 = pneg %p107
      $region42: #{bce_loss.1} parent=27 // pred_check_branch
        %298 = sbr.rel (%p296) target = $region44
      $region43: #{bce_loss.1} parent=27 // pred_region
        _
      $region44: #{bce_loss.1} parent=27 // pred_fallthru
        _
    $region28: #{bce_loss.1} parent=5 // pred_fallthru
      _
    %p299 = scmp.le.s32.totalorder 2, %s8
    // Predicated region
    $region45: #{bce_loss.1} parent=5 // pred_check
      %p300 = pneg %p299
    $region46: #{bce_loss.1} parent=5 // pred_check_branch
      %302 = sbr.rel (%p300) target = $region48
    $region47: #{bce_loss.1} parent=5 // pred_region
      %s303 = ssub.s32 %s8, 2
      // Predicated region
      $region49: #{bce_loss.1} parent=47 // pred_check
        %p304 = pneg %p113
      $region50: #{bce_loss.1} parent=47 // pred_check_branch
        %306 = sbr.rel (%p304) target = $region52
      $region51: #{bce_loss.1} parent=47 // pred_region
        %p307 = scmp.lt.s32.totalorder %s19, 1
        %s308 = scalar_select %p307, %s19, 1
        %s309 = smul.addr %s308, 8
        %s310 = scalar_lea.vmem %s2, %s309
      $region52: #{bce_loss.1} parent=47 // pred_fallthru
        _
    $region48: #{bce_loss.1} parent=5 // pred_fallthru
      _
  $region6: #{bce_loss.1} parent=0 // loop_footer
    %s12 = sadd.s32 1, %s8
  $region7: #{bce_loss.1} parent=0 // loop_footer_branch
    %7 = sbr.rel target = $region3
  $region8: #{bce_loss.1} parent=0 // loop_exit
    _

</llo_original>
